<compile_context>
chip_gen: v5e
topology: v5e:2x2
jax: 0.10.0
libtpu: 0.0.40
codegen_flags: <defaults>
</compile_context>

<pallas_src>
import jax
import jax.numpy as jnp
from jax.experimental import pallas as pl
from jax.experimental.pallas import tpu as pltpu


def _round_up(n, m):
    return ((n + m - 1) // m) * m


def _make_kernel(num_hidden, output_dim, out_w_cols, compute_dtype):
    """Build a kernel for a fixed number of hidden layers.

    Ref order: x, (w_i, b_i) * num_hidden, w_out, b_out, w_ctrl, fused_out.
    When output_dim == 1 the wrapper passes w_out as a (1, last_hidden) row
    vector so the final layer runs on the VPU; w_ctrl is always passed as a
    (1, input_dim) row vector.
    """
    vpu_out = output_dim == 1
    cast_hidden = compute_dtype != jnp.float32

    def kernel(*refs):
        x_ref = refs[0]
        idx = 1
        x_f32 = x_ref[...].astype(jnp.float32)   # torch's x.clone()
        h = x_f32

        # Hidden stack: tanh(h @ W + b).  MXU dot with f32 accumulation;
        # inputs/weights optionally bf16 (weights pre-cast by the wrapper).
        for _ in range(num_hidden):
            w_ref = refs[idx]
            b_ref = refs[idx + 1]
            idx += 2
            lhs = h.astype(compute_dtype) if cast_hidden else h
            h = jnp.tanh(
                jnp.dot(lhs, w_ref[...], preferred_element_type=jnp.float32)
                + b_ref[...]
            )

        w_out_ref = refs[idx]
        b_out_ref = refs[idx + 1]
        w_ctrl_ref = refs[idx + 2]
        out_ref = refs[idx + 3]

        if vpu_out:
            # N=1 output layer: VPU multiply + XLU lane reduce (skip the MXU).
            v = jnp.tanh(
                jnp.sum(h * w_out_ref[...], axis=-1, keepdims=True)
                + b_out_ref[...]
            )
        else:
            v = jnp.tanh(
                jnp.dot(h, w_out_ref[...], preferred_element_type=jnp.float32)
                + b_out_ref[...]
            )

        # Control branch: bias-free N=1 dot -> VPU multiply + lane reduce.
        u = jnp.sum(x_f32 * w_ctrl_ref[...], axis=-1, keepdims=True)

        bm = x_ref.shape[0]
        if vpu_out:
            # Narrow lane-dense slab via iota/select (pure VALU, no XLU).
            lane_idx = jax.lax.broadcasted_iota(jnp.int32, (bm, out_w_cols), 1)
            slab = jnp.where(lane_idx == 0, v, jnp.where(lane_idx == 1, u, 0.0))
            out_ref[...] = slab.astype(out_ref.dtype)
        else:
            # Zero-init + narrow column stores; no lane-axis concatenate.
            out_ref[...] = jnp.zeros((bm, out_w_cols), out_ref.dtype)
            out_ref[:, :output_dim] = v.astype(out_ref.dtype)
            out_ref[:, output_dim:output_dim + 1] = u.astype(out_ref.dtype)

    return kernel


def multilayer_net_forward(x, hidden_params, out_w, out_b, ctrl_w, *,
                           block_batch=2048, no_grid_max_batch=4096,
                           compute_dtype=jnp.float32):
    """MultiLayerNet forward pass as a single Pallas call.

    Args:
      x:                 (batch, input_dim) float32
      hidden_params:     list of (W_T, b) with W_T (in, out) and b (1, out)
      out_w:             (last_hidden, output_dim)
      out_b:             (1, output_dim)
      ctrl_w:            (input_dim, 1)  -- control weight transposed, no bias
      block_batch:       max batch tile for the gridded (large-batch) path
      no_grid_max_batch: use the gridless path for batches up to this size
      compute_dtype:     dtype for hidden-layer matmul operands (f32 or bf16);
                         accumulation is always f32.

    Returns:
      (V, u) with V (batch, output_dim), u (batch, 1)
    """
    x = x.astype(jnp.float32)
    batch, input_dim = x.shape
    output_dim = out_w.shape[1]
    num_hidden = len(hidden_params)

    out_w_cols = max(8, output_dim + 1)   # narrow fused-output width

    # Pre-shape the tiny N=1 weights as lane row-vectors for the VPU paths.
    ctrl_row = ctrl_w.reshape(1, input_dim).astype(jnp.float32)
    if output_dim == 1:
        out_w_k = out_w.reshape(1, out_w.shape[0]).astype(jnp.float32)
    else:
        out_w_k = out_w.astype(jnp.float32)
    out_b = out_b.astype(jnp.float32)

    weight_inputs = []
    for w, b in hidden_params:
        weight_inputs.extend([w.astype(compute_dtype), b.astype(jnp.float32)])
    weight_inputs.extend([out_w_k, out_b, ctrl_row])

    kernel = _make_kernel(num_hidden, output_dim, out_w_cols, compute_dtype)

    if batch <= no_grid_max_batch:
        # Small / medium batch: one shot, no grid, no pipelining machinery.
        inputs = [x] + weight_inputs
        vmem = pltpu.MemorySpace.VMEM
        fused = pl.pallas_call(
            kernel,
            in_specs=[pl.BlockSpec(memory_space=vmem) for _ in inputs],
            out_specs=pl.BlockSpec(memory_space=vmem),
            out_shape=jax.ShapeDtypeStruct((batch, out_w_cols), jnp.float32),
        )(*inputs)
        fused_valid = fused
    else:
        # Large batch: tile the batch axis; weights stay VMEM-resident.
        num_steps = max(2, pl.cdiv(batch, block_batch))   # >=2 steps (megacore)
        bm = _round_up(pl.cdiv(batch, num_steps), 8)
        padded_batch = bm * num_steps
        x_in = x
        if padded_batch != batch:
            x_in = jnp.pad(x, ((0, padded_batch - batch), (0, 0)))
        inputs = [x_in] + weight_inputs

        def const_spec(arr):
            ndim = arr.ndim
            return pl.BlockSpec(arr.shape, lambda i, _n=ndim: (0,) * _n)

        in_specs = ([pl.BlockSpec((bm, input_dim), lambda i: (i, 0))]
                    + [const_spec(a) for a in weight_inputs])
        fused = pl.pallas_call(
            kernel,
            grid=(num_steps,),
            in_specs=in_specs,
            out_specs=pl.BlockSpec((bm, out_w_cols), lambda i: (i, 0)),
            out_shape=jax.ShapeDtypeStruct((padded_batch, out_w_cols),
                                           jnp.float32),
            compiler_params=pltpu.CompilerParams(
                dimension_semantics=("parallel",)   # megacore sharding on v7x
            ),
        )(*inputs)
        fused_valid = fused[:batch]

    v = fused_valid[:, :output_dim]
    u = fused_valid[:, output_dim:output_dim + 1]
    return v, u


def init_params(key, input_dim, hidden_layers, output_dim):
    """Deterministic parameter init (Linear-style uniform), pre-transposed."""
    keys = jax.random.split(key, 2 * len(hidden_layers) + 3)
    hidden_params = []
    current_dim = input_dim
    ki = 0
    for h_dim in hidden_layers:
        bound = 1.0 / jnp.sqrt(current_dim)
        w = jax.random.uniform(
            keys[ki], (current_dim, h_dim), jnp.float32, -bound, bound)
        b = jax.random.uniform(
            keys[ki + 1], (1, h_dim), jnp.float32, -bound, bound)
        hidden_params.append((w, b))
        current_dim = h_dim
        ki += 2
    bound = 1.0 / jnp.sqrt(current_dim)
    out_w = jax.random.uniform(
        keys[ki], (current_dim, output_dim), jnp.float32, -bound, bound)
    out_b = jax.random.uniform(
        keys[ki + 1], (1, output_dim), jnp.float32, -bound, bound)
    # control: Linear(input_dim, 1, bias=False); lqr_init-style weight
    ctrl_w = jax.random.uniform(
        keys[ki + 2], (input_dim, 1), jnp.float32, -1.0, 1.0)
    return hidden_params, out_w, out_b, ctrl_w


def reference_forward(x, hidden_params, out_w, out_b, ctrl_w):
    """Pure-JAX f32 reference for correctness check."""
    h = x
    for w, b in hidden_params:
        h = jnp.tanh(h @ w + b)
    v = jnp.tanh(h @ out_w + out_b)
    u = x @ ctrl_w
    return v, u


if __name__ == "__main__":
    input_dim, hidden_layers, output_dim = 4, [32, 32], 1

    key = jax.random.PRNGKey(0)
    k_x, k_p, k_xb = jax.random.split(key, 3)
    hidden_params, out_w, out_b, ctrl_w = init_params(
        k_p, input_dim, hidden_layers, output_dim)

    # --- small-batch path (gridless, everything VMEM-resident) ---
    batch = 8
    x = jax.random.normal(k_x, (batch, input_dim), jnp.float32)
    v, u = multilayer_net_forward(x, hidden_params, out_w, out_b, ctrl_w)
    jax.block_until_ready((v, u))
    v_ref, u_ref = reference_forward(x, hidden_params, out_w, out_b, ctrl_w)
    assert v.shape == (batch, output_dim) and u.shape == (batch, 1)
    assert jnp.allclose(v, v_ref, atol=1e-5), "V mismatch vs reference (small)"
    assert jnp.allclose(u, u_ref, atol=1e-5), "u mismatch vs reference (small)"

    # --- large ragged batch (grid over batch, >=2 steps, wrapper zero-pad) ---
    big_batch = 4100
    xb = jax.random.normal(k_xb, (big_batch, input_dim), jnp.float32)
    vb, ub = multilayer_net_forward(
        xb, hidden_params, out_w, out_b, ctrl_w)
    jax.block_until_ready((vb, ub))
    vb_ref, ub_ref = reference_forward(xb, hidden_params, out_w, out_b, ctrl_w)
    assert vb.shape == (big_batch, output_dim) and ub.shape == (big_batch, 1)
    assert jnp.allclose(vb, vb_ref, atol=1e-5), "V mismatch vs reference (big)"
    assert jnp.allclose(ub, ub_ref, atol=1e-5), "u mismatch vs reference (big)"

    # --- bf16 hidden-matmul variant (recommended on v6e/v7x) ---
    vb16, ub16 = multilayer_net_forward(
        xb, hidden_params, out_w, out_b, ctrl_w, compute_dtype=jnp.bfloat16)
    jax.block_until_ready((vb16, ub16))
    assert jnp.allclose(vb16, vb_ref, atol=1e-1), "V mismatch (bf16 hidden)"
    assert jnp.allclose(ub16, ub_ref, atol=1e-5), "u mismatch (bf16 hidden)"

    print("KERNEL_OK")
</pallas_src>

<mosaic_0001>
module attributes {stable_mosaic.version = 11 : i64} {
  func.func @kernel(%arg0: memref<8x4xf32, #tpu.memory_space<vmem>>, %arg1: memref<4x32xf32, #tpu.memory_space<vmem>>, %arg2: memref<1x32xf32, #tpu.memory_space<vmem>>, %arg3: memref<32x32xf32, #tpu.memory_space<vmem>>, %arg4: memref<1x32xf32, #tpu.memory_space<vmem>>, %arg5: memref<1x32xf32, #tpu.memory_space<vmem>>, %arg6: memref<1x1xf32, #tpu.memory_space<vmem>>, %arg7: memref<1x4xf32, #tpu.memory_space<vmem>>, %arg8: memref<8x8xf32, #tpu.memory_space<vmem>>) attributes {dimension_semantics = [], scalar_prefetch = 0 : i64, scratch_operands = 0 : i64, tpu.core_type = #tpu.core_type<tc>} {
    %c0 = arith.constant 0 : index
    %c0_0 = arith.constant 0 : index
    %0 = vector.load %arg0[%c0, %c0_0] : memref<8x4xf32, #tpu.memory_space<vmem>>, vector<8x4xf32>
    %c0_1 = arith.constant 0 : index
    %c0_2 = arith.constant 0 : index
    %1 = vector.load %arg1[%c0_1, %c0_2] : memref<4x32xf32, #tpu.memory_space<vmem>>, vector<4x32xf32>
    %cst = arith.constant dense<0.000000e+00> : vector<8x32xf32>
    %2 = tpu.matmul %0, %1, %cst {dimension_numbers = #tpu.dot_dimension_numbers<[1], [0], [0], [1], [0, 0, 1, 1], [], []>} : vector<8x4xf32>, vector<4x32xf32>, vector<8x32xf32> -> vector<8x32xf32>
    %c0_3 = arith.constant 0 : index
    %c0_4 = arith.constant 0 : index
    %3 = vector.load %arg2[%c0_3, %c0_4] : memref<1x32xf32, #tpu.memory_space<vmem>>, vector<1x32xf32>
    %4 = vector.broadcast %3 : vector<1x32xf32> to vector<8x32xf32>
    %5 = arith.addf %2, %4 : vector<8x32xf32>
    %6 = math.tanh %5 : vector<8x32xf32>
    %c0_5 = arith.constant 0 : index
    %c0_6 = arith.constant 0 : index
    %7 = vector.load %arg3[%c0_5, %c0_6] : memref<32x32xf32, #tpu.memory_space<vmem>>, vector<32x32xf32>
    %cst_7 = arith.constant dense<0.000000e+00> : vector<8x32xf32>
    %8 = tpu.matmul %6, %7, %cst_7 {dimension_numbers = #tpu.dot_dimension_numbers<[1], [0], [0], [1], [0, 0, 1, 1], [], []>} : vector<8x32xf32>, vector<32x32xf32>, vector<8x32xf32> -> vector<8x32xf32>
    %c0_8 = arith.constant 0 : index
    %c0_9 = arith.constant 0 : index
    %9 = vector.load %arg4[%c0_8, %c0_9] : memref<1x32xf32, #tpu.memory_space<vmem>>, vector<1x32xf32>
    %10 = vector.broadcast %9 : vector<1x32xf32> to vector<8x32xf32>
    %11 = arith.addf %8, %10 : vector<8x32xf32>
    %12 = math.tanh %11 : vector<8x32xf32>
    %c0_10 = arith.constant 0 : index
    %c0_11 = arith.constant 0 : index
    %13 = vector.load %arg5[%c0_10, %c0_11] : memref<1x32xf32, #tpu.memory_space<vmem>>, vector<1x32xf32>
    %14 = vector.broadcast %13 : vector<1x32xf32> to vector<8x32xf32>
    %15 = arith.mulf %12, %14 : vector<8x32xf32>
    %cst_12 = arith.constant dense<0.000000e+00> : vector<8xf32>
    %16 = vector.multi_reduction <add>, %15, %cst_12 [1] : vector<8x32xf32> to vector<8xf32>
    %17 = vector.shape_cast %16 : vector<8xf32> to vector<8x1xf32>
    %c0_13 = arith.constant 0 : index
    %c0_14 = arith.constant 0 : index
    %18 = vector.load %arg6[%c0_13, %c0_14] : memref<1x1xf32, #tpu.memory_space<vmem>>, vector<1x1xf32>
    %19 = vector.broadcast %18 : vector<1x1xf32> to vector<8x1xf32>
    %20 = arith.addf %17, %19 : vector<8x1xf32>
    %21 = math.tanh %20 : vector<8x1xf32>
    %c0_15 = arith.constant 0 : index
    %c0_16 = arith.constant 0 : index
    %22 = vector.load %arg7[%c0_15, %c0_16] : memref<1x4xf32, #tpu.memory_space<vmem>>, vector<1x4xf32>
    %23 = vector.broadcast %22 : vector<1x4xf32> to vector<8x4xf32>
    %24 = arith.mulf %0, %23 : vector<8x4xf32>
    %cst_17 = arith.constant dense<0.000000e+00> : vector<8xf32>
    %25 = vector.multi_reduction <add>, %24, %cst_17 [1] : vector<8x4xf32> to vector<8xf32>
    %26 = vector.shape_cast %25 : vector<8xf32> to vector<8x1xf32>
    %27 = tpu.iota {dimensions = array<i32: 1>} : vector<8x8xi32>
    %c0_i32 = arith.constant 0 : i32
    %28 = vector.broadcast %c0_i32 : i32 to vector<8x8xi32>
    %29 = arith.cmpi eq, %27, %28 : vector<8x8xi32>
    %c1_i32 = arith.constant 1 : i32
    %30 = vector.broadcast %c1_i32 : i32 to vector<8x8xi32>
    %31 = arith.cmpi eq, %27, %30 : vector<8x8xi32>
    %cst_18 = arith.constant 0.000000e+00 : f32
    %32 = vector.shape_cast %26 : vector<8x1xf32> to vector<8x1xf32>
    %33 = vector.broadcast %32 : vector<8x1xf32> to vector<8x8xf32>
    %34 = vector.broadcast %cst_18 : f32 to vector<8x8xf32>
    %35 = arith.select %31, %33, %34 : vector<8x8xi1>, vector<8x8xf32>
    %36 = vector.shape_cast %21 : vector<8x1xf32> to vector<8x1xf32>
    %37 = vector.broadcast %36 : vector<8x1xf32> to vector<8x8xf32>
    %38 = arith.select %29, %37, %35 : vector<8x8xi1>, vector<8x8xf32>
    %c0_19 = arith.constant 0 : index
    %c0_20 = arith.constant 0 : index
    %39 = vector.load %arg8[%c0_19, %c0_20] : memref<8x8xf32, #tpu.memory_space<vmem>>, vector<8x8xf32>
    tpu.vector_store %arg8[%c0_19, %c0_20], %38 {strides = array<i32>} : memref<8x8xf32, #tpu.memory_space<vmem>>, vector<8x8xf32>,
    return
  }
}

</mosaic_0001>

<llo_original>
// kernel: tpu_custom_call.1
$region0: #{tpu_custom_call.1}
  #allocation0 [shape = 'u32[]', space=smem, size = 0x4, offset = 0x4, fixed_abs, tag = 'smem constant byte address 0x4 - core index']
  #allocation1 [shape = 'u32[72,128]{1,0:T(1,128)}', space=vmem, size = 0x9000, scoped, tag = 'internal scratch']
  #allocation2 [shape = 'f32[1,1]{1,0:T(1,128)S(1)}', space=vmem, size = 0x200, scoped, tag = 'scoped memory for tpu_custom_call.1']
  %s0 = inlined_call_operand.vmem [shape: f32[8,4], index: 0, kind: input, shape index: {}]
  %s1 = inlined_call_operand.vmem [shape: f32[4,32], index: 1, kind: input, shape index: {}]
  %s2 = inlined_call_operand.vmem [shape: f32[1,32], index: 2, kind: input, shape index: {}]
  %s3 = inlined_call_operand.hbm [shape: f32[32,32], index: 3, kind: input, shape index: {}]
  %s4 = inlined_call_operand.vmem [shape: f32[1,32], index: 4, kind: input, shape index: {}]
  %s5 = inlined_call_operand.vmem [shape: f32[1,32], index: 5, kind: input, shape index: {}]
  %s6 = inlined_call_operand.<no memory space> [shape: f32[1,1], index: 6, kind: input, shape index: {}]
  %s7 = inlined_call_operand.vmem [shape: f32[1,4], index: 7, kind: input, shape index: {}]
  %s8 = inlined_call_operand.hbm [shape: f32[8,8], index: 8, kind: output, shape index: {}]
  %s9 = sld [smem:[#allocation0]]
  $region46: #{tpu_custom_call.1} parent=0
    _
  %s11 = ssub.s32 1, %s9
  %s12 = scalar_select 0, %s11, %s9
  %v13 = vstv %s6
  %14 = vst [vmem:[#allocation2] sm:$0x1] %v13
  $region1: #{tpu_custom_call.1} parent=0
    #allocation3 [shape = 'u8[16384]{0}', space=vmem, size = 0x4000, scoped, tag = 'input window, operand 3, single buffered']
    #allocation4 [shape = 's32[1]{0}', space=sflag, size = 0x4, scoped, tag = 'scoped memory for tpu_custom_call.1']
    #allocation5 [shape = 's32[1]{0}', space=sflag, size = 0x4, scoped, tag = 'scoped memory for tpu_custom_call.1']
    #allocation6 [shape = 'u8[4096]{0}', space=vmem, size = 0x1000, scoped, tag = 'output window, operand 0, single buffered']
    %15 = vsyncpa [#allocation4], 0
    %16 = vsyncpa [#allocation5], 0
    // Predicated region
    $region2: #{tpu_custom_call.1} parent=1 // pred_check
      _
    $region3: #{tpu_custom_call.1} parent=1 // pred_check_branch
      %18 = sbr.rel (0) target = $region5
    $region4: #{tpu_custom_call.1} parent=1 // pred_region
      _
    $region5: #{tpu_custom_call.1} parent=1 // pred_fallthru
      _
    // Predicated region
    $region6: #{tpu_custom_call.1} parent=1 // pred_check
      _
    $region7: #{tpu_custom_call.1} parent=1 // pred_check_branch
      %20 = sbr.rel (0) target = $region9
    $region8: #{tpu_custom_call.1} parent=1 // pred_region
      _
    $region9: #{tpu_custom_call.1} parent=1 // pred_fallthru
      _
    // Predicated region
    $region10: #{tpu_custom_call.1} parent=1 // pred_check
      _
    $region11: #{tpu_custom_call.1} parent=1 // pred_check_branch
      %22 = sbr.rel (0) target = $region13
    $region12: #{tpu_custom_call.1} parent=1 // pred_region
      _
    $region13: #{tpu_custom_call.1} parent=1 // pred_fallthru
      _
    // Predicated region
    $region14: #{tpu_custom_call.1} parent=1 // pred_check
      _
    $region15: #{tpu_custom_call.1} parent=1 // pred_check_branch
      %24 = sbr.rel (0) target = $region17
    $region16: #{tpu_custom_call.1} parent=1 // pred_region
      %26 = vsyncadd [#allocation4], 0
      %s27 = sshll.u32 %s3, 4
      %s28 = int_to_ptr.hbm [resolvable:$true] %s27
      %s29 = sshll.u32 [#allocation3], 4
      %s30 = int_to_ptr.vmem [resolvable:$true] %s29
      %35 = dma.hbm_to_vmem [thread:$0]  %s28, 512, %s30, [#allocation4], 128, 128, 8
    $region17: #{tpu_custom_call.1} parent=1 // pred_fallthru
      _
    // Predicated region
    $region18: #{tpu_custom_call.1} parent=1 // pred_check
      _
    $region19: #{tpu_custom_call.1} parent=1 // pred_check_branch
      %37 = sbr.rel (0) target = $region21
    $region20: #{tpu_custom_call.1} parent=1 // pred_region
      _
    $region21: #{tpu_custom_call.1} parent=1 // pred_fallthru
      _
    // Predicated region
    $region22: #{tpu_custom_call.1} parent=1 // pred_check
      _
    $region23: #{tpu_custom_call.1} parent=1 // pred_check_branch
      %39 = sbr.rel (0) target = $region25
    $region24: #{tpu_custom_call.1} parent=1 // pred_region
      _
    $region25: #{tpu_custom_call.1} parent=1 // pred_fallthru
      _
    // Predicated region
    $region26: #{tpu_custom_call.1} parent=1 // pred_check
      _
    $region27: #{tpu_custom_call.1} parent=1 // pred_check_branch
      %41 = sbr.rel (0) target = $region29
    $region28: #{tpu_custom_call.1} parent=1 // pred_region
      _
    $region29: #{tpu_custom_call.1} parent=1 // pred_fallthru
      _
    // Predicated region
    $region30: #{tpu_custom_call.1} parent=1 // pred_check
      _
    $region31: #{tpu_custom_call.1} parent=1 // pred_check_branch
      %43 = sbr.rel (0) target = $region33
    $region32: #{tpu_custom_call.1} parent=1 // pred_region
      _
    $region33: #{tpu_custom_call.1} parent=1 // pred_fallthru
      _
    // Predicated region
    $region34: #{tpu_custom_call.1} parent=1 // pred_check
      _
    $region35: #{tpu_custom_call.1} parent=1 // pred_check_branch
      %45 = sbr.rel (0) target = $region37
    $region36: #{tpu_custom_call.1} parent=1 // pred_region
      %47 = dma.done [#allocation4], 512
    $region37: #{tpu_custom_call.1} parent=1 // pred_fallthru
      _
    %v48 = vld [vmem:[%s0] sm:$0xff]
    %v49 = vld [vmem:[%s1] sm:$0xf]
    %v50 = vld [vmem:[%s2] sm:$0x1]
    %v52 = vperm.slane %v50, 0
    %vm54 = vcmask 31744
    %v56 = vsel %vm54, %v48, 0
    %vm58 = vcmask 1043456
    %v60 = vsel %vm58, %v49, 0
    %62 = vmatpush.msra.mxu0 0.0
    %63 = vmatpush.msra.mxu0 0.0
    %64 = vmatpush.msra.mxu0 0.0
    %65 = vmatpush.msra.mxu0 0.0
    %66 = vmatpush.msra.mxu0 0.0
    %67 = vmatpush.msra.mxu0 0.0
    %68 = vmatpush.msra.mxu0 0.0
    %69 = vmatpush.msra.mxu0 0.0
    %70 = vmatpush.msra.mxu0 0.0
    %71 = vmatpush.msra.mxu0 0.0
    %72 = vmatpush.msra.mxu0 0.0
    %73 = vmatpush.msra.mxu0 0.0
    %74 = vmatpush.msra.mxu0 0.0
    %75 = vmatpush.msra.mxu0 0.0
    %76 = vmatpush.msra.mxu0 0.0
    %77 = vmatpush.msra.mxu0 %v60
    %78 = vmatmul.f32.gmra.mxu0 %v56
    %v79 = vpop.f32.mrf.mxu0
    %v80 = vadd.f32 %v52, %v79
    %81 = vdwg.mxu0
    %v82 = vtanh.pop %v80
    %v83 = vld [vmem:[#allocation3] sm:$0xff]
    %v84 = vld [vmem:[#allocation3 + $0x8] sm:$0xff]
    %v85 = vld [vmem:[#allocation3 + $0x10] sm:$0xff]
    %v86 = vld [vmem:[#allocation3 + $0x18] sm:$0xff]
    %v87 = vld [vmem:[%s4] sm:$0x1]
    %v89 = vperm.slane %v87, 0
    %vm91 = vcmask 261120
    %v93 = vsel %vm91, %v82, 0
    %95 = vmatpush.msra.mxu0 0.0
    %96 = vmatpush.msra.mxu0 0.0
    %97 = vmatpush.msra.mxu0 0.0
    %98 = vmatpush.msra.mxu0 0.0
    %99 = vmatpush.msra.mxu0 0.0
    %100 = vmatpush.msra.mxu0 0.0
    %101 = vmatpush.msra.mxu0 0.0
    %102 = vmatpush.msra.mxu0 0.0
    %103 = vmatpush.msra.mxu0 0.0
    %104 = vmatpush.msra.mxu0 0.0
    %105 = vmatpush.msra.mxu0 0.0
    %106 = vmatpush.msra.mxu0 0.0
    %107 = vmatpush.msra.mxu0 %v86
    %108 = vmatpush.msra.mxu0 %v85
    %109 = vmatpush.msra.mxu0 %v84
    %110 = vmatpush.msra.mxu0 %v83
    %111 = vmatmul.f32.gmra.mxu0 %v93
    %v112 = vpop.f32.mrf.mxu0
    %v113 = vadd.f32 %v89, %v112
    %114 = vdwg.mxu0
    %v115 = vtanh.pop %v113
    %v116 = vld [vmem:[%s5] sm:$0x1]
    %v118 = vperm.slane %v116, 0
    %v120 = vmul.f32 %v115, %v118
    %v121 = vsel %vm91, %v120, 0.0
    %122 = vadd.xlane.f32.xlu0 %v121
    %v123 = vpop.xlane.xlu0 %122
    %v124 = vld [vmem:[#allocation2] sm:$0x1]
    %v126 = vperm.slane %v124, 0
    %v128 = vadd.f32 %v123, %v126
    %v129 = vtanh.pop %v128
    %v130 = vld [vmem:[%s7] sm:$0x1]
    %v132 = vperm.slane %v130, 0
    %v134 = vmul.f32 %v48, %v132
    %v135 = vsel %vm54, %v134, 0.0
    %136 = vadd.xlane.f32.xlu0 %v135
    %v137 = vpop.xlane.xlu0 %136
    %v138 = vlaneseq
    %v139 = vand.u32 %v138, 127
    %vm140 = vcmp.eq.s32.totalorder %v139, 0
    %vm141 = vcmp.eq.s32.totalorder %v139, 1
    %v142 = vsel %vm141, %v137, 0.0
    %144 = vset.pattern.permute.xlu0 0
    %145 = vperm.xlu0 %144, %v129
    %v146 = vpop.permute.xlu0 %145
    %v148 = vsel %vm140, %v146, %v142
    %vm149 = vcmask 64512
    %150 = vst.msk [vmem:[#allocation6] sm:$0xff] %vm149, %v148
    // Predicated region
    $region38: #{tpu_custom_call.1} parent=1 // pred_check
      _
    $region39: #{tpu_custom_call.1} parent=1 // pred_check_branch
      %152 = sbr.rel (0) target = $region41
    $region40: #{tpu_custom_call.1} parent=1 // pred_region
      %154 = vsyncadd [#allocation5], 0
      %s156 = sshll.u32 [#allocation6], 4
      %s157 = int_to_ptr.vmem [resolvable:$true] %s156
      %s158 = sshll.u32 %s8, 4
      %s159 = int_to_ptr.hbm [resolvable:$true] %s158
      %161 = dma.vmem_to_hbm [thread:$0]  %s157, 128, %s159, [#allocation5]
    $region41: #{tpu_custom_call.1} parent=1 // pred_fallthru
      _
    // Predicated region
    $region42: #{tpu_custom_call.1} parent=1 // pred_check
      _
    $region43: #{tpu_custom_call.1} parent=1 // pred_check_branch
      %163 = sbr.rel (0) target = $region45
    $region44: #{tpu_custom_call.1} parent=1 // pred_region
      %165 = dma.done [#allocation5], 128
    $region45: #{tpu_custom_call.1} parent=1 // pred_fallthru
      _
    %166 = vsyncpa [#allocation4], 1
    %167 = vsyncpa [#allocation5], 1

</llo_original>
